<compile_context>
chip_gen: v6e
topology: v6e:2x2x1
jax: 0.10.0
libtpu: 0.0.40
codegen_flags: <defaults>
</compile_context>

<pallas_src>
import jax
import jax.numpy as jnp
from jax import lax
from jax.experimental import pallas as pl
from jax.experimental.pallas import tpu as pltpu


def _shift_lanes(x, s):
    """out[..., q] = x[..., (q + s) % Q].  Explicit two-slice rotate (unambiguous direction);
    lowers to a lane rotate/select on the XLU."""
    if s == 0:
        return x
    return jnp.concatenate([x[..., s:], x[..., :s]], axis=-1)


def _make_kernel(B, H, W, C, Cout, K):
    HW = H * W

    def kernel(x_ref, wft_ref, o_ref):
        # x_ref:   (B, C, H*W)    channel-major images, spatial flattened onto lanes
        # wft_ref: (Cout, K*K*C)  fused depthwise*pointwise weight (constant block -> resident)
        # o_ref:   (B, Cout, H*W) lane-dense wide output (columns q = h*W + w; h>=Ho / w>=Wo garbage)

        # Lay the B images side by side on the lane axis (256-aligned placements, no rotates).
        if B == 1:
            x_wide = x_ref[0]                                            # (C, HW)
        else:
            x_wide = jnp.concatenate([x_ref[b] for b in range(B)], axis=-1)  # (C, B*HW)

        # im2col as K*K static lane shifts of the whole slab, stacked along sublanes.
        # Cross-image / wrap bleed only reaches invalid output columns (discarded by the wrapper).
        pieces = []
        for kh in range(K):
            for kw in range(K):
                pieces.append(_shift_lanes(x_wide, kh * W + kw))         # each (C, B*HW)
        patches = jnp.concatenate(pieces, axis=0)                        # (K*K*C, B*HW)

        # Single MXU contraction, native orientation, native dtypes, f32 accumulation.
        out_t = jnp.dot(wft_ref[...], patches,
                        preferred_element_type=jnp.float32)              # (Cout, B*HW)
        out_t = out_t.astype(o_ref.dtype)

        # 128-aligned, unmasked lane-dense stores per image.
        for b in range(B):
            o_ref[b] = out_t[:, b * HW:(b + 1) * HW]

    return kernel


def _choose_image_block(N, max_block=16):
    """Largest divisor B of N that still leaves >= 2 grid steps (keep both v7x TCs busy)."""
    target_steps = 2 if N >= 2 else 1
    best = 1
    for b in range(1, min(N, max_block) + 1):
        if N % b == 0 and N // b >= target_steps:
            best = b
    return best


def depthwise_separable_conv(x_nchw, w_dw, w_pw, kernel_size=3):
    """x_nchw: (N, Cin, H, W); w_dw: (Cin, 1, K, K); w_pw: (Cout, Cin, 1, 1).
    Returns pointwise(depthwise(x)) with stride=1, padding=0, no bias: (N, Cout, Ho, Wo)."""
    N, C, H, W = x_nchw.shape
    K = kernel_size
    Cout = w_pw.shape[0]
    Ho, Wo = H - K + 1, W - K + 1
    HW = H * W
    KKC = K * K * C

    # Exact weight fusion (done in f32, cast once to the input dtype):
    #   w_fused_t[co, (kh*K+kw)*C + c] = wd[c, kh, kw] * wp[co, c]
    wd = w_dw[:, 0, :, :].astype(jnp.float32)                      # (C, K, K)
    wp = w_pw[:, :, 0, 0].astype(jnp.float32)                      # (Cout, C)
    wd_hwc = jnp.transpose(wd, (1, 2, 0))                          # (K, K, C)
    w_fused = wd_hwc[:, :, :, None] * jnp.transpose(wp)[None, None, :, :]   # (K, K, C, Cout)
    w_fused_t = jnp.transpose(w_fused.reshape(KKC, Cout), (1, 0)).astype(x_nchw.dtype)  # (Cout, KKC)

    # NCHW -> (N, C, H*W): same contiguous buffer, free reshape; no input transpose at all.
    x_flat = x_nchw.reshape(N, C, HW)

    B = _choose_image_block(N)
    steps = N // B
    kernel = _make_kernel(B, H, W, C, Cout, K)

    out_wide = pl.pallas_call(
        kernel,
        out_shape=jax.ShapeDtypeStruct((N, Cout, HW), x_nchw.dtype),
        grid_spec=pltpu.PrefetchScalarGridSpec(
            num_scalar_prefetch=0,
            grid=(steps,),
            in_specs=[
                pl.BlockSpec((B, C, HW), lambda i: (i, 0, 0)),
                pl.BlockSpec((Cout, KKC), lambda i: (0, 0)),   # constant block -> stays resident
            ],
            out_specs=pl.BlockSpec((B, Cout, HW), lambda i: (i, 0, 0)),
        ),
        compiler_params=pltpu.CompilerParams(
            dimension_semantics=("parallel",)),    # image blocks split across TensorCores
    )(x_flat, w_fused_t)

    # Wide output columns are q = h*W + w; valid region is h < Ho, w < Wo.
    return out_wide.reshape(N, Cout, H, W)[:, :, :Ho, :Wo]


def _reference(x_nchw, w_dw, w_pw):
    """Pure-JAX reference with PyTorch NCHW/OIHW semantics (depthwise then pointwise)."""
    C = x_nchw.shape[1]
    dn = ("NCHW", "OIHW", "NCHW")
    dw = lax.conv_general_dilated(
        x_nchw, w_dw, window_strides=(1, 1), padding="VALID",
        dimension_numbers=dn, feature_group_count=C)
    pw = lax.conv_general_dilated(
        dw, w_pw, window_strides=(1, 1), padding="VALID", dimension_numbers=dn)
    return pw


if __name__ == "__main__":
    key = jax.random.PRNGKey(0)
    k_x, k_dw, k_pw = jax.random.split(key, 3)

    N, Cin, H, W = 2, 4, 16, 16
    Cout, K = 8, 3

    x = jax.random.normal(k_x, (N, Cin, H, W), dtype=jnp.float32)
    w_depthwise = jax.random.normal(k_dw, (Cin, 1, K, K), dtype=jnp.float32) * 0.1
    w_pointwise = jax.random.normal(k_pw, (Cout, Cin, 1, 1), dtype=jnp.float32) * 0.1

    # Primary config: N=2 -> B=1 per step, 2 parallel grid steps (both v7x TCs busy).
    out = jax.block_until_ready(
        depthwise_separable_conv(x, w_depthwise, w_pointwise, kernel_size=K))
    ref = _reference(x, w_depthwise, w_pointwise)
    assert out.shape == ref.shape == (N, Cout, H - K + 1, W - K + 1)
    assert jnp.allclose(out, ref, atol=1e-4, rtol=1e-4)

    # Also exercise the batched-contraction path: N=4 -> B=2 images per step, 2 parallel steps.
    x4 = jax.random.normal(k_x, (4, Cin, H, W), dtype=jnp.float32)
    out4 = jax.block_until_ready(
        depthwise_separable_conv(x4, w_depthwise, w_pointwise, kernel_size=K))
    ref4 = _reference(x4, w_depthwise, w_pointwise)
    assert out4.shape == ref4.shape
    assert jnp.allclose(out4, ref4, atol=1e-4, rtol=1e-4)

    print("KERNEL_OK")
</pallas_src>

<mosaic_0001>
module attributes {stable_mosaic.version = 11 : i64} {
  func.func @kernel(%arg0: i32, %arg1: memref<1x4x256xf32, #tpu.memory_space<vmem>>, %arg2: memref<8x36xf32, #tpu.memory_space<vmem>>, %arg3: memref<1x8x256xf32, #tpu.memory_space<vmem>>) attributes {dimension_semantics = [#tpu.dimension_semantics<parallel>], iteration_bounds = array<i64: 2>, scalar_prefetch = 0 : i64, scratch_operands = 0 : i64, tpu.core_type = #tpu.core_type<tc>, window_params = [{transform_indices = @transform_0, window_bounds = array<i64: 1, 4, 256>}, {pipeline_mode = #tpu.pipeline_mode<synchronous>, transform_indices = @transform_1, window_bounds = array<i64: 8, 36>}, {transform_indices = @transform_2, window_bounds = array<i64: 1, 8, 256>}]} {
    %c0 = arith.constant 0 : index
    %c0_0 = arith.constant 0 : index
    %c0_1 = arith.constant 0 : index
    %0 = vector.load %arg1[%c0, %c0_0, %c0_1] : memref<1x4x256xf32, #tpu.memory_space<vmem>>, vector<1x4x256xf32>
    %1 = vector.shape_cast %0 : vector<1x4x256xf32> to vector<4x256xf32>
    %2 = vector.extract_strided_slice %1 {offsets = [0, 1], sizes = [4, 255], strides = [1, 1]} : vector<4x256xf32> to vector<4x255xf32>
    %3 = vector.extract_strided_slice %1 {offsets = [0, 0], sizes = [4, 1], strides = [1, 1]} : vector<4x256xf32> to vector<4x1xf32>
    %4 = tpu.concatenate %2, %3 in 1 : vector<4x255xf32>, vector<4x1xf32> -> vector<4x256xf32>
    %5 = vector.extract_strided_slice %1 {offsets = [0, 2], sizes = [4, 254], strides = [1, 1]} : vector<4x256xf32> to vector<4x254xf32>
    %6 = vector.extract_strided_slice %1 {offsets = [0, 0], sizes = [4, 2], strides = [1, 1]} : vector<4x256xf32> to vector<4x2xf32>
    %7 = tpu.concatenate %5, %6 in 1 : vector<4x254xf32>, vector<4x2xf32> -> vector<4x256xf32>
    %8 = vector.extract_strided_slice %1 {offsets = [0, 16], sizes = [4, 240], strides = [1, 1]} : vector<4x256xf32> to vector<4x240xf32>
    %9 = vector.extract_strided_slice %1 {offsets = [0, 0], sizes = [4, 16], strides = [1, 1]} : vector<4x256xf32> to vector<4x16xf32>
    %10 = tpu.concatenate %8, %9 in 1 : vector<4x240xf32>, vector<4x16xf32> -> vector<4x256xf32>
    %11 = vector.extract_strided_slice %1 {offsets = [0, 17], sizes = [4, 239], strides = [1, 1]} : vector<4x256xf32> to vector<4x239xf32>
    %12 = vector.extract_strided_slice %1 {offsets = [0, 0], sizes = [4, 17], strides = [1, 1]} : vector<4x256xf32> to vector<4x17xf32>
    %13 = tpu.concatenate %11, %12 in 1 : vector<4x239xf32>, vector<4x17xf32> -> vector<4x256xf32>
    %14 = vector.extract_strided_slice %1 {offsets = [0, 18], sizes = [4, 238], strides = [1, 1]} : vector<4x256xf32> to vector<4x238xf32>
    %15 = vector.extract_strided_slice %1 {offsets = [0, 0], sizes = [4, 18], strides = [1, 1]} : vector<4x256xf32> to vector<4x18xf32>
    %16 = tpu.concatenate %14, %15 in 1 : vector<4x238xf32>, vector<4x18xf32> -> vector<4x256xf32>
    %17 = vector.extract_strided_slice %1 {offsets = [0, 32], sizes = [4, 224], strides = [1, 1]} : vector<4x256xf32> to vector<4x224xf32>
    %18 = vector.extract_strided_slice %1 {offsets = [0, 0], sizes = [4, 32], strides = [1, 1]} : vector<4x256xf32> to vector<4x32xf32>
    %19 = tpu.concatenate %17, %18 in 1 : vector<4x224xf32>, vector<4x32xf32> -> vector<4x256xf32>
    %20 = vector.extract_strided_slice %1 {offsets = [0, 33], sizes = [4, 223], strides = [1, 1]} : vector<4x256xf32> to vector<4x223xf32>
    %21 = vector.extract_strided_slice %1 {offsets = [0, 0], sizes = [4, 33], strides = [1, 1]} : vector<4x256xf32> to vector<4x33xf32>
    %22 = tpu.concatenate %20, %21 in 1 : vector<4x223xf32>, vector<4x33xf32> -> vector<4x256xf32>
    %23 = vector.extract_strided_slice %1 {offsets = [0, 34], sizes = [4, 222], strides = [1, 1]} : vector<4x256xf32> to vector<4x222xf32>
    %24 = vector.extract_strided_slice %1 {offsets = [0, 0], sizes = [4, 34], strides = [1, 1]} : vector<4x256xf32> to vector<4x34xf32>
    %25 = tpu.concatenate %23, %24 in 1 : vector<4x222xf32>, vector<4x34xf32> -> vector<4x256xf32>
    %26 = tpu.concatenate %1, %4, %7, %10, %13, %16, %19, %22, %25 in 0 : vector<4x256xf32>, vector<4x256xf32>, vector<4x256xf32>, vector<4x256xf32>, vector<4x256xf32>, vector<4x256xf32>, vector<4x256xf32>, vector<4x256xf32>, vector<4x256xf32> -> vector<36x256xf32>
    %c0_2 = arith.constant 0 : index
    %c0_3 = arith.constant 0 : index
    %27 = vector.load %arg2[%c0_2, %c0_3] : memref<8x36xf32, #tpu.memory_space<vmem>>, vector<8x36xf32>
    %cst = arith.constant dense<0.000000e+00> : vector<8x256xf32>
    %28 = tpu.matmul %27, %26, %cst {dimension_numbers = #tpu.dot_dimension_numbers<[1], [0], [0], [1], [0, 0, 1, 1], [], []>} : vector<8x36xf32>, vector<36x256xf32>, vector<8x256xf32> -> vector<8x256xf32>
    %c0_4 = arith.constant 0 : index
    %c0_5 = arith.constant 0 : index
    %c0_6 = arith.constant 0 : index
    %29 = vector.load %arg3[%c0_4, %c0_5, %c0_6] : memref<1x8x256xf32, #tpu.memory_space<vmem>>, vector<1x8x256xf32>
    %30 = vector.shape_cast %29 : vector<1x8x256xf32> to vector<8x256xf32>
    %31 = vector.shape_cast %28 : vector<8x256xf32> to vector<1x8x256xf32>
    tpu.vector_store %arg3[%c0_4, %c0_5, %c0_6], %31 {strides = array<i32>} : memref<1x8x256xf32, #tpu.memory_space<vmem>>, vector<1x8x256xf32>,
    return
  }
  func.func @transform_0(%arg0: i32) -> (i32, i32, i32) {
    %c0_i32 = arith.constant 0 : i32
    %c0_i32_0 = arith.constant 0 : i32
    %c0_i32_1 = arith.constant 0 : i32
    return %arg0, %c0_i32, %c0_i32_0 : i32, i32, i32
  }
  func.func @transform_1(%arg0: i32) -> (i32, i32) {
    %c0_i32 = arith.constant 0 : i32
    %c0_i32_0 = arith.constant 0 : i32
    %c0_i32_1 = arith.constant 0 : i32
    return %c0_i32, %c0_i32_0 : i32, i32
  }
  func.func @transform_2(%arg0: i32) -> (i32, i32, i32) {
    %c0_i32 = arith.constant 0 : i32
    %c0_i32_0 = arith.constant 0 : i32
    %c0_i32_1 = arith.constant 0 : i32
    return %arg0, %c0_i32, %c0_i32_0 : i32, i32, i32
  }
}

</mosaic_0001>

<llo_original>
// kernel: tpu_custom_call.1
$region0: #{tpu_custom_call.1}
  #allocation0 [shape = 'u32[]', space=smem, size = 0x4, offset = 0x4, fixed_abs, tag = 'smem constant byte address 0x4 - core index']
  #allocation1 [shape = 'u32[144,128]{1,0:T(1,128)}', space=vmem, size = 0x12000, scoped, tag = 'internal scratch']
  %s0 = inlined_call_operand.hbm [shape: f32[2,4,256], index: 0, kind: input, shape index: {}]
  %s1 = inlined_call_operand.hbm [shape: f32[8,36], index: 1, kind: input, shape index: {}]
  %s2 = inlined_call_operand.hbm [shape: f32[2,8,256], index: 2, kind: output, shape index: {}]
  %s3 = sld [smem:[#allocation0]]
  $region49: #{tpu_custom_call.1} parent=0
    _
  %s5 = ssub.s32 1, %s3
  %s6 = scalar_select 0, %s5, %s3
  $region1: #{tpu_custom_call.1} parent=0
    #allocation2 [shape = 'u8[8192]{0}', space=vmem, size = 0x2000, scoped, tag = 'input window, operand 0']
    #allocation3 [shape = 's32[2]{0}', space=sflag, size = 0x8, scoped, tag = 'scoped memory for tpu_custom_call.1']
    #allocation4 [shape = 's32[2]{0}', space=sflag, size = 0x8, scoped, tag = 'scoped memory for tpu_custom_call.1']
    #allocation5 [shape = 'u8[4096]{0}', space=vmem, size = 0x1000, scoped, tag = 'input window, operand 1, single buffered']
    #allocation6 [shape = 's32[1]{0}', space=sflag, size = 0x4, scoped, tag = 'scoped memory for tpu_custom_call.1']
    #allocation7 [shape = 'u8[16384]{0}', space=vmem, size = 0x4000, scoped, tag = 'output window, operand 0']
    %7 = vsyncpa [#allocation3], 0
    %s8 = scalar_lea.sflag [#allocation3], 1
    %9 = vsyncpa %s8, 0
    %10 = vsyncpa [#allocation6], 0
    %11 = vsyncpa [#allocation4], 0
    %s12 = scalar_lea.sflag [#allocation4], 1
    %13 = vsyncpa %s12, 0
    loop: start=0, step=1, limit=4
    $region2: #{tpu_custom_call.1} parent=1 // loop_pre_header
      _
    $region3: #{tpu_custom_call.1} parent=1 // loop_header
      %s15 = sphi 0, %s19
      %p16 = scmp.ge.s32.totalorder %s15, 4
      %s25 = sphi 0, %s27
      %s28 = sphi 0, %s25
      %s29 = sphi 0, %s28
      %s45 = sphi 0, %s29
      %s49 = sphi 0, %s49
      %s51 = sphi 0, %s49
      %s52 = sphi 0, %s51
      %s66 = sphi 0, %s52
      %s72 = sphi 0, %s74
      %s75 = sphi 0, %s72
      %s76 = sphi 0, %s75
      %s92 = sphi 0, %s76
    $region4: #{tpu_custom_call.1} parent=1 // loop_header_branch
      %18 = sbr.rel (%p16) target = $region8
    $region5: #{tpu_custom_call.1} parent=1 // loop_body
      %s20 = ssub.s32 %s15, 1
      %s21 = ssub.s32 %s15, 2
      %s22 = sadd.s32 %s15, 1
      %s23 = ssub.s32 %s15, %s22
      %p24 = scmp.eq.s32.totalorder %s23, 0
      %s26 = sadd.s32 %s25, 1
      %s27 = scalar_select %p24, %s25, %s26
      %p30 = pneg %p24
      %p31 = scmp.eq.s32.totalorder %s15, 1
      %p32 = por %p30, %p31
      %p33 = scmp.ne.s32.totalorder %s25, %s28
      %p34 = scmp.eq.s32.totalorder %s15, 0
      %p35 = por %p33, %p34
      %p36 = scmp.ne.s32.totalorder %s25, %s28
      %p37 = scmp.eq.s32.totalorder %s20, 1
      %p38 = por %p36, %p37
      %p39 = scmp.ne.s32.totalorder %s28, %s29
      %p40 = scmp.eq.s32.totalorder %s20, 0
      %p41 = por %p39, %p40
      %p42 = scmp.ne.s32.totalorder %s28, %s29
      %p43 = scmp.eq.s32.totalorder %s21, 1
      %p44 = por %p42, %p43
      %p46 = scmp.ne.s32.totalorder %s29, %s45
      %p47 = scmp.eq.s32.totalorder %s21, 0
      %p48 = por %p46, %p47
      %s50 = sadd.s32 %s49, 1
      %p53 = scmp.eq.s32.totalorder %s15, 1
      %p54 = scmp.ne.s32.totalorder %s49, %s51
      %p55 = scmp.eq.s32.totalorder %s15, 0
      %p56 = por %p54, %p55
      %p57 = scmp.ne.s32.totalorder %s49, %s51
      %p58 = scmp.eq.s32.totalorder %s20, 1
      %p59 = por %p57, %p58
      %p60 = scmp.ne.s32.totalorder %s51, %s52
      %p61 = scmp.eq.s32.totalorder %s20, 0
      %p62 = por %p60, %p61
      %p63 = scmp.ne.s32.totalorder %s51, %s52
      %p64 = scmp.eq.s32.totalorder %s21, 1
      %p65 = por %p63, %p64
      %p67 = scmp.ne.s32.totalorder %s52, %s66
      %p68 = scmp.eq.s32.totalorder %s21, 0
      %p69 = por %p67, %p68
      %s70 = ssub.s32 %s15, %s22
      %p71 = scmp.eq.s32.totalorder %s70, 0
      %s73 = sadd.s32 %s72, 1
      %s74 = scalar_select %p71, %s72, %s73
      %p77 = pneg %p71
      %p78 = scmp.eq.s32.totalorder %s15, 1
      %p79 = por %p77, %p78
      %p80 = scmp.ne.s32.totalorder %s72, %s75
      %p81 = scmp.eq.s32.totalorder %s15, 0
      %p82 = por %p80, %p81
      %p83 = scmp.ne.s32.totalorder %s72, %s75
      %p84 = scmp.eq.s32.totalorder %s20, 1
      %p85 = por %p83, %p84
      %p86 = scmp.ne.s32.totalorder %s75, %s76
      %p87 = scmp.eq.s32.totalorder %s20, 0
      %p88 = por %p86, %p87
      %p89 = scmp.ne.s32.totalorder %s75, %s76
      %p90 = scmp.eq.s32.totalorder %s21, 1
      %p91 = por %p89, %p90
      %p93 = scmp.ne.s32.totalorder %s76, %s92
      %p94 = scmp.eq.s32.totalorder %s21, 0
      %p95 = por %p93, %p94
      %p96 = scmp.le.s32.totalorder 1, %s15
      %p97 = scmp.lt.s32.totalorder %s15, 3
      %p98 = pnand %p96, %p97
      %p99 = pneg %p98
      // Predicated region
      $region9: #{tpu_custom_call.1} parent=5 // pred_check
        _
      $region10: #{tpu_custom_call.1} parent=5 // pred_check_branch
        %101 = sbr.rel (%p98) target = $region12
      $region11: #{tpu_custom_call.1} parent=5 // pred_region
        %s102 = ssub.s32 %s15, 1
        // Predicated region
        $region13: #{tpu_custom_call.1} parent=11 // pred_check
          %p103 = pneg %p62
        $region14: #{tpu_custom_call.1} parent=11 // pred_check_branch
          %105 = sbr.rel (%p103) target = $region16
        $region15: #{tpu_custom_call.1} parent=11 // pred_region
          %s107 = ssub.s32 128, 128
          %108 = vsyncadd [#allocation6], %s107
          %s110 = sshll.u32 [#allocation5], 4
          %s111 = int_to_ptr.vmem [resolvable:$true] %s110
          %113 = dma.hbm_to_vmem [thread:$0]  %s1, 128, %s111, [#allocation6]
        $region16: #{tpu_custom_call.1} parent=11 // pred_fallthru
          _
      $region12: #{tpu_custom_call.1} parent=5 // pred_fallthru
        _
      %p114 = scmp.lt.s32.totalorder %s15, 2
      // Predicated region
      $region17: #{tpu_custom_call.1} parent=5 // pred_check
        %p115 = pneg %p114
      $region18: #{tpu_custom_call.1} parent=5 // pred_check_branch
        %117 = sbr.rel (%p115) target = $region20
      $region19: #{tpu_custom_call.1} parent=5 // pred_region
        // Predicated region
        $region21: #{tpu_custom_call.1} parent=19 // pred_check
          %p118 = pneg %p35
        $region22: #{tpu_custom_call.1} parent=19 // pred_check_branch
          %120 = sbr.rel (%p118) target = $region24
        $region23: #{tpu_custom_call.1} parent=19 // pred_region
          %s121 = sand.u32 %s25, 1
          %s122 = scalar_lea.sflag [#allocation3], %s121
          %s123 = sand.u32 %s25, 1
          %s124 = smul.addr %s123, 8
          %s125 = scalar_lea.vmem [#allocation2], %s124
          %s127 = ssub.s32 128, 128
          %128 = vsyncadd %s122, %s127
          %s129 = smul.addr %s15, 2
          %s130 = smul.addr %s129, 64
          %s131 = scalar_lea.hbm %s0, %s130
          %s133 = sshll.u32 %s125, 4
          %s134 = int_to_ptr.vmem [resolvable:$true] %s133
          %136 = dma.hbm_to_vmem [thread:$0]  %s131, 128, %s134, %s122
        $region24: #{tpu_custom_call.1} parent=19 // pred_fallthru
          _
      $region20: #{tpu_custom_call.1} parent=5 // pred_fallthru
        _
      %p137 = scmp.le.s32.totalorder 1, %s15
      %p138 = scmp.lt.s32.totalorder %s15, 3
      %p139 = pnand %p137, %p138
      %p140 = pneg %p139
      // Predicated region
      $region25: #{tpu_custom_call.1} parent=5 // pred_check
        _
      $region26: #{tpu_custom_call.1} parent=5 // pred_check_branch
        %142 = sbr.rel (%p139) target = $region28
      $region27: #{tpu_custom_call.1} parent=5 // pred_region
        %s143 = ssub.s32 %s15, 1
        %s144 = sand.u32 %s28, 1
        %s145 = scalar_lea.sflag [#allocation3], %s144
        %s146 = sand.u32 %s28, 1
        %s147 = smul.addr %s146, 8
        %s148 = scalar_lea.vmem [#allocation2], %s147
        // Predicated region
        $region29: #{tpu_custom_call.1} parent=27 // pred_check
          %p149 = pneg %p41
        $region30: #{tpu_custom_call.1} parent=27 // pred_check_branch
          %151 = sbr.rel (%p149) target = $region32
        $region31: #{tpu_custom_call.1} parent=27 // pred_region
          %152 = dma.done %s145, 128
        $region32: #{tpu_custom_call.1} parent=27 // pred_fallthru
          _
        // Predicated region
        $region33: #{tpu_custom_call.1} parent=27 // pred_check
          %p153 = pneg %p62
        $region34: #{tpu_custom_call.1} parent=27 // pred_check_branch
          %155 = sbr.rel (%p153) target = $region36
        $region35: #{tpu_custom_call.1} parent=27 // pred_region
          %156 = dma.done [#allocation6], 128
        $region36: #{tpu_custom_call.1} parent=27 // pred_fallthru
          _
        %s157 = sand.u32 %s28, 1
        %s158 = scalar_lea.sflag [#allocation3], %s157
        %s159 = sand.u32 %s28, 1
        %s160 = smul.addr %s159, 8
        %s161 = scalar_lea.vmem [#allocation2], %s160
        %p162 = pneg %p41
        %p163 = pneg %p38
        %p164 = pneg %p62
        %p165 = pneg %p59
        %p166 = pneg %p88
        %p167 = pneg %p85
        %s168 = sand.u32 %s75, 1
        %s169 = scalar_lea.sflag [#allocation4], %s168
        %s170 = sand.u32 %s75, 1
        %s171 = smul.addr %s170, 16
        %s172 = scalar_lea.vmem [#allocation7], %s171
        %v173 = vld [vmem:[%s148] sm:$0xff]
        %v175 = vcombine.high %v173, %v173
        %176 = vrot.lane.b32.xlu0 %v173, 127
        %v177 = vpop.permute.xlu0 %176
        %178 = vrot.lane.b32.xlu0 %v175, 127
        %v179 = vpop.permute.xlu0 %178
        %vm180 = vcmask 1039360
        %v181 = vsel %vm180, %v177, %v179
        %v184 = vsel %vm180, %v179, %v177
        %185 = vrot.lane.b32.xlu0 %v173, 126
        %v186 = vpop.permute.xlu0 %185
        %187 = vrot.lane.b32.xlu0 %v175, 126
        %v188 = vpop.permute.xlu0 %187
        %vm189 = vcmask 1031168
        %v190 = vsel %vm189, %v186, %v188
        %v194 = vsel %vm189, %v188, %v186
        %195 = vrot.lane.b32.xlu0 %v173, 112
        %v196 = vpop.permute.xlu0 %195
        %197 = vrot.lane.b32.xlu0 %v175, 112
        %v198 = vpop.permute.xlu0 %197
        %vm199 = vcmask 916480
        %v200 = vsel %vm199, %v196, %v198
        %v203 = vsel %vm199, %v198, %v196
        %204 = vrot.lane.b32.xlu0 %v173, 111
        %v205 = vpop.permute.xlu0 %204
        %206 = vrot.lane.b32.xlu0 %v175, 111
        %v207 = vpop.permute.xlu0 %206
        %vm208 = vcmask 908288
        %v209 = vsel %vm208, %v205, %v207
        %v213 = vsel %vm208, %v207, %v205
        %214 = vrot.lane.b32.xlu0 %v173, 110
        %v215 = vpop.permute.xlu0 %214
        %216 = vrot.lane.b32.xlu0 %v175, 110
        %v217 = vpop.permute.xlu0 %216
        %vm218 = vcmask 900096
        %v219 = vsel %vm218, %v215, %v217
        %v222 = vsel %vm218, %v217, %v215
        %223 = vrot.lane.b32.xlu0 %v173, 96
        %v224 = vpop.permute.xlu0 %223
        %225 = vrot.lane.b32.xlu0 %v175, 96
        %v226 = vpop.permute.xlu0 %225
        %vm227 = vcmask 785408
        %v228 = vsel %vm227, %v224, %v226
        %v232 = vsel %vm227, %v226, %v224
        %233 = vrot.lane.b32.xlu0 %v173, 95
        %v234 = vpop.permute.xlu0 %233
        %235 = vrot.lane.b32.xlu0 %v175, 95
        %v236 = vpop.permute.xlu0 %235
        %vm237 = vcmask 777216
        %v238 = vsel %vm237, %v234, %v236
        %v241 = vsel %vm237, %v236, %v234
        %242 = vrot.lane.b32.xlu0 %v173, 94
        %v243 = vpop.permute.xlu0 %242
        %244 = vrot.lane.b32.xlu0 %v175, 94
        %v245 = vpop.permute.xlu0 %244
        %vm246 = vcmask 769024
        %v247 = vsel %vm246, %v243, %v245
        %v250 = vsel %vm246, %v245, %v243
        %v253 = vrot.slane %v181, 4
        %v254 = vrot.slane %v184, 4
        %v258 = vrot.slane %v200, 4
        %v259 = vrot.slane %v203, 4
        %v263 = vrot.slane %v219, 4
        %v264 = vrot.slane %v222, 4
        %v268 = vrot.slane %v238, 4
        %v269 = vrot.slane %v241, 4
        %vm272 = vcmask 1043456
        %v273 = vsel %vm272, %v173, %v253
        %v274 = vsel %vm272, %v175, %v254
        %v275 = vsel %vm272, %v190, %v258
        %v276 = vsel %vm272, %v194, %v259
        %v277 = vsel %vm272, %v209, %v263
        %v278 = vsel %vm272, %v213, %v264
        %v279 = vsel %vm272, %v228, %v268
        %v280 = vsel %vm272, %v232, %v269
        %v281 = vld [vmem:[#allocation5] sm:$0xff]
        %vm282 = vcmask 293888
        %v284 = vsel %vm282, %v281, 0
        %v286 = vsel %vm272, %v247, 0
        %v289 = vsel %vm272, %v250, 0
        %291 = vmatprep.subr.mxu0 0.0
        %292 = vmatpush1.msra.mxu0 0.0
        %293 = vmatprep.subr.mxu0 0.0
        %294 = vmatpush1.msra.mxu0 0.0
        %295 = vmatprep.subr.mxu0 0.0
        %296 = vmatpush1.msra.mxu0 0.0
        %297 = vmatprep.subr.mxu0 0.0
        %298 = vmatpush1.msra.mxu0 0.0
        %299 = vmatprep.subr.mxu0 0.0
        %300 = vmatpush1.msra.mxu0 0.0
        %301 = vmatprep.subr.mxu0 0.0
        %302 = vmatpush1.msra.mxu0 0.0
        %303 = vmatprep.subr.mxu0 0.0
        %304 = vmatpush1.msra.mxu0 0.0
        %305 = vmatprep.subr.mxu0 0.0
        %306 = vmatpush1.msra.mxu0 0.0
        %307 = vmatprep.subr.mxu0 0.0
        %308 = vmatpush1.msra.mxu0 0.0
        %309 = vmatprep.subr.mxu0 0.0
        %310 = vmatpush1.msra.mxu0 0.0
        %311 = vmatprep.subr.mxu0 0.0
        %312 = vmatpush1.msra.mxu0 0.0
        %313 = vmatprep.subr.mxu0 %v289
        %314 = vmatpush1.msra.mxu0 %v286
        %315 = vmatprep.subr.mxu0 %v280
        %316 = vmatpush1.msra.mxu0 %v279
        %317 = vmatprep.subr.mxu0 %v278
        %318 = vmatpush1.msra.mxu0 %v277
        %319 = vmatprep.subr.mxu0 %v276
        %320 = vmatpush1.msra.mxu0 %v275
        %321 = vmatprep.subr.mxu0 %v274
        %322 = vmatpush1.msra.mxu0 %v273
        %323 = vmatprep.subr.mxu0 0.0
        %324 = vmatpush2.msra.mxu0 0.0
        %325 = vmatprep.subr.mxu0 0.0
        %326 = vmatpush2.msra.mxu0 0.0
        %327 = vmatprep.subr.mxu0 0.0
        %328 = vmatpush2.msra.mxu0 0.0
        %329 = vmatprep.subr.mxu0 0.0
        %330 = vmatpush2.msra.mxu0 0.0
        %331 = vmatprep.subr.mxu0 0.0
        %332 = vmatpush2.msra.mxu0 0.0
        %333 = vmatprep.subr.mxu0 0.0
        %334 = vmatpush2.msra.mxu0 0.0
        %335 = vmatprep.subr.mxu0 0.0
        %336 = vmatpush2.msra.mxu0 0.0
        %337 = vmatprep.subr.mxu0 0.0
        %338 = vmatpush2.msra.mxu0 0.0
        %339 = vmatprep.subr.mxu0 0.0
        %340 = vmatpush2.msra.mxu0 0.0
        %341 = vmatprep.subr.mxu0 0.0
        %342 = vmatpush2.msra.mxu0 0.0
        %343 = vmatprep.subr.mxu0 0.0
        %344 = vmatpush2.msra.mxu0 0.0
        %345 = vmatprep.subr.mxu0 0.0
        %346 = vmatpush2.msra.mxu0 0.0
        %347 = vmatprep.subr.mxu0 0.0
        %348 = vmatpush2.msra.mxu0 0.0
        %349 = vmatprep.subr.mxu0 0.0
        %350 = vmatpush2.msra.mxu0 0.0
        %351 = vmatprep.subr.mxu0 0.0
        %352 = vmatpush2.msra.mxu0 0.0
        %353 = vmatprep.subr.mxu0 0.0
        %354 = vmatpush2.msra.mxu0 0.0
        %355 = vmatprep.mubr.f32.mxu0 0.0
        %356 = vmatmul.mubr.f32.gmra.mxu0 %v284
        %v357 = vpop.f32.mrf.mxu0
        %v358 = vadd.f32 0.0, %v357
        %v359 = vpop.f32.mrf.mxu0
        %v360 = vadd.f32 0.0, %v359
        %361 = vdwg.mxu0
        %362 = vst [vmem:[%s172] sm:$0xff] %v358
        %363 = vst [vmem:[%s172 + $0x8] sm:$0xff] %v360
        %s364 = sand.u32 %s75, 1
        %s365 = scalar_lea.sflag [#allocation4], %s364
        %s366 = sand.u32 %s75, 1
        %s367 = smul.addr %s366, 16
        %s368 = scalar_lea.vmem [#allocation7], %s367
        // Predicated region
        $region37: #{tpu_custom_call.1} parent=27 // pred_check
          %p369 = pneg %p85
        $region38: #{tpu_custom_call.1} parent=27 // pred_check_branch
          %371 = sbr.rel (%p369) target = $region40
        $region39: #{tpu_custom_call.1} parent=27 // pred_region
          %s373 = ssub.s32 256, 256
          %374 = vsyncadd %s365, %s373
          %s375 = smul.addr %s20, 2
          %s376 = smul.addr %s375, 128
          %s377 = scalar_lea.hbm %s2, %s376
          %s379 = sshll.u32 %s368, 4
          %s380 = int_to_ptr.vmem [resolvable:$true] %s379
          %382 = dma.vmem_to_hbm [thread:$0]  %s380, 256, %s377, %s365
        $region40: #{tpu_custom_call.1} parent=27 // pred_fallthru
          _
      $region28: #{tpu_custom_call.1} parent=5 // pred_fallthru
        _
      %p383 = scmp.le.s32.totalorder 2, %s15
      // Predicated region
      $region41: #{tpu_custom_call.1} parent=5 // pred_check
        %p384 = pneg %p383
      $region42: #{tpu_custom_call.1} parent=5 // pred_check_branch
        %386 = sbr.rel (%p384) target = $region44
      $region43: #{tpu_custom_call.1} parent=5 // pred_region
        %s387 = ssub.s32 %s15, 2
        // Predicated region
        $region45: #{tpu_custom_call.1} parent=43 // pred_check
          %p388 = pneg %p91
        $region46: #{tpu_custom_call.1} parent=43 // pred_check_branch
          %390 = sbr.rel (%p388) target = $region48
        $region47: #{tpu_custom_call.1} parent=43 // pred_region
          %s391 = sand.u32 %s76, 1
          %s392 = scalar_lea.sflag [#allocation4], %s391
          %s393 = sand.u32 %s76, 1
          %s394 = smul.addr %s393, 16
          %s395 = scalar_lea.vmem [#allocation7], %s394
          %396 = dma.done %s392, 256
        $region48: #{tpu_custom_call.1} parent=43 // pred_fallthru
          _
      $region44: #{tpu_custom_call.1} parent=5 // pred_fallthru
        _
    $region6: #{tpu_custom_call.1} parent=1 // loop_footer
      %s19 = sadd.s32 1, %s15
    $region7: #{tpu_custom_call.1} parent=1 // loop_footer_branch
      %14 = sbr.rel target = $region3
    $region8: #{tpu_custom_call.1} parent=1 // loop_exit
      _
    %397 = vsyncpa [#allocation3], 1
    %s398 = scalar_lea.sflag [#allocation3], 1
    %399 = vsyncpa %s398, 1
    %400 = vsyncpa [#allocation6], 1
    %401 = vsyncpa [#allocation4], 1
    %s402 = scalar_lea.sflag [#allocation4], 1
    %403 = vsyncpa %s402, 1

</llo_original>
